<compile_context>
chip_gen: v7x
topology: tpu7x:2x2x1
jax: 0.10.0
libtpu: 0.0.40
codegen_flags: <defaults>
</compile_context>

<pallas_src>
import functools

import jax
import jax.numpy as jnp
from jax.experimental import pallas as pl
from jax.experimental.pallas import tpu as pltpu


def _head_block_kernel(pooled_ref, w1_ref, b1_ref, w2_ref, b2_ref, out_ref):
    """One grid step == one block of AH annotator heads applied to the whole batch."""
    x = pooled_ref[...].astype(jnp.bfloat16)                                       # (B, H)
    # Layer 1: fused across the AH heads -> a single lane-dense MXU matmul, f32 accumulation.
    z = jnp.dot(x, w1_ref[0], preferred_element_type=jnp.float32) + b1_ref[0]      # (B, AH*H)
    h = jnp.tanh(z).astype(jnp.bfloat16)                                           # tanh/bias in f32
    # Layer 2: block-diagonal weights -> a single matmul, lane-dense (B, AH*L) output slab.
    out_ref[0] = jnp.dot(h, w2_ref[0], preferred_element_type=jnp.float32) + b2_ref[0]


def _choose_heads_per_block(A, H, L, requested, vmem_budget_bytes=24 * 1024 * 1024):
    """Largest AH <= requested whose double-buffered bf16 weight blocks fit the VMEM budget."""
    ah = max(1, min(requested, A))
    while ah > 1:
        w_bytes = 2 * (ah * H * H * 2              # fused layer-1 block (bf16), double-buffered
                       + (ah * H) * (ah * L) * 2   # block-diag layer-2 block (bf16)
                       + ah * H * 4 + ah * L * 4)  # f32 biases
        if w_bytes <= vmem_budget_bytes:
            break
        ah -= 1
    # Prefer >= 2 grid steps so the "parallel" head-group axis can shard across v7x's 2 TCs.
    if A >= 2:
        ah = min(ah, max(1, A // 2))
    return ah


@functools.partial(jax.jit, static_argnames=("heads_per_block",))
def per_annotator_logits(pooled, w1, b1, w2, b2, heads_per_block=8):
    """pooled: (B, H); w1: (A, H, H); b1: (A, H); w2: (A, H, L); b2: (A, L) -> logits (B, A, L)."""
    B, H = pooled.shape
    A = w1.shape[0]
    L = w2.shape[-1]

    AH = _choose_heads_per_block(A, H, L, heads_per_block)
    G = -(-A // AH)                 # number of head blocks == grid steps
    A_pad = G * AH
    pad = A_pad - A
    if pad:
        w1 = jnp.concatenate([w1, jnp.zeros((pad, H, H), w1.dtype)], axis=0)
        b1 = jnp.concatenate([b1, jnp.zeros((pad, H), b1.dtype)], axis=0)
        w2 = jnp.concatenate([w2, jnp.zeros((pad, H, L), w2.dtype)], axis=0)
        b2 = jnp.concatenate([b2, jnp.zeros((pad, L), b2.dtype)], axis=0)

    # Fused layer-1 weights: (G, H, AH*H); column order = (head-in-block, hidden unit).
    w1_fused = (w1.reshape(G, AH, H, H).transpose(0, 2, 1, 3)
                  .reshape(G, H, AH * H).astype(jnp.bfloat16))
    b1_fused = b1.reshape(G, 1, AH * H).astype(jnp.float32)

    # Block-diagonal layer-2 weights: (G, AH*H, AH*L); off-diagonal blocks are zero so each
    # head's hidden slice only multiplies its own W2.  One-time wrapper cost; L << H so the
    # extra weight traffic is negligible.
    eye = jnp.eye(AH, dtype=w2.dtype)
    w2_bd = (jnp.einsum("gahl,ab->gahbl", w2.reshape(G, AH, H, L), eye)
               .reshape(G, AH * H, AH * L).astype(jnp.bfloat16))
    b2_fused = b2.reshape(G, 1, AH * L).astype(jnp.float32)

    pooled_f32 = pooled.astype(jnp.float32)

    grid_spec = pltpu.PrefetchScalarGridSpec(
        num_scalar_prefetch=0,
        grid=(G,),
        in_specs=[
            pl.BlockSpec((B, H), lambda g: (0, 0)),                  # pooled (shared across blocks)
            pl.BlockSpec((1, H, AH * H), lambda g: (g, 0, 0)),       # fused W1 block
            pl.BlockSpec((1, 1, AH * H), lambda g: (g, 0, 0)),       # fused b1 block
            pl.BlockSpec((1, AH * H, AH * L), lambda g: (g, 0, 0)),  # block-diag W2 block
            pl.BlockSpec((1, 1, AH * L), lambda g: (g, 0, 0)),       # fused b2 block
        ],
        out_specs=pl.BlockSpec((1, B, AH * L), lambda g: (g, 0, 0)),
    )

    cost = pl.CostEstimate(
        flops=2 * B * H * H * A_pad + 2 * B * H * L * AH * A_pad,
        transcendentals=B * H * A_pad,
        bytes_accessed=(A_pad * H * H * 2 + A_pad * H * AH * L * 2
                        + A_pad * (H + L) * 4 + G * B * H * 4 + G * B * AH * L * 4),
    )

    out_slab = pl.pallas_call(
        _head_block_kernel,
        out_shape=jax.ShapeDtypeStruct((G, B, AH * L), jnp.float32),
        grid_spec=grid_spec,
        compiler_params=pltpu.CompilerParams(
            dimension_semantics=("parallel",),
        ),
        cost_estimate=cost,
    )(pooled_f32, w1_fused, b1_fused, w2_bd, b2_fused)

    # Un-interleave (G, B, AH*L) -> (B, A, L) to match the PyTorch stacking order.
    logits = (out_slab.reshape(G, B, AH, L)
                      .transpose(1, 0, 2, 3)
                      .reshape(B, A_pad, L)[:, :A, :])
    return logits


def synthetic_encoder(input_ids, attention_mask, embed_table):
    """Deterministic stand-in for the pretrained transformer: embedding lookup, take CLS token."""
    hidden_state = embed_table[input_ids]          # (B, S, H)
    del attention_mask                             # interface parity only; unused by the stand-in
    pooled_output = hidden_state[:, 0]             # (B, H)  == hidden_state[:, 0] in PyTorch
    return pooled_output


def forward(input_ids, attention_mask, params):
    """Eval-mode forward: returns (loss, logits) mirroring SequenceClassifierOutput."""
    pooled = synthetic_encoder(input_ids, attention_mask, params["embed_table"])
    logits = per_annotator_logits(
        pooled, params["w1"], params["b1"], params["w2"], params["b2"]
    )
    loss = jnp.array(0.0, dtype=jnp.float32)       # no batch_losses in eval mode
    return loss, logits


def _reference_logits_f32(pooled, w1, b1, w2, b2):
    h = jnp.tanh(jnp.einsum("bh,ahd->abd", pooled, w1) + b1[:, None, :])
    out = jnp.einsum("abh,ahl->abl", h, w2) + b2[:, None, :]
    return jnp.transpose(out, (1, 0, 2))


def _reference_logits_bf16(pooled, w1, b1, w2, b2):
    """Reference matching the kernel's numerics (bf16 weights/activations, f32 accumulation)."""
    xb = pooled.astype(jnp.bfloat16)
    z = jnp.einsum("bh,ahd->abd", xb, w1.astype(jnp.bfloat16),
                   preferred_element_type=jnp.float32) + b1[:, None, :]
    h = jnp.tanh(z).astype(jnp.bfloat16)
    out = jnp.einsum("abh,ahl->abl", h, w2.astype(jnp.bfloat16),
                     preferred_element_type=jnp.float32) + b2[:, None, :]
    return jnp.transpose(out, (1, 0, 2))


if __name__ == "__main__":
    # Small, deterministic problem sizes
    B, S, H, A, L, VOCAB = 2, 8, 32, 8, 2, 50

    key = jax.random.PRNGKey(0)
    k_embed, k_ids, k_w1, k_w2 = jax.random.split(key, 4)

    # Deterministic "pretrained" embedding table (stand-in encoder weights)
    embed_table = jax.random.normal(k_embed, (VOCAB, H), dtype=jnp.float32) * 0.02

    # Head parameters: weights ~ N(0, 1), biases zero (matches _init_linear)
    w1 = jax.random.normal(k_w1, (A, H, H), dtype=jnp.float32)
    b1 = jnp.zeros((A, H), dtype=jnp.float32)
    w2 = jax.random.normal(k_w2, (A, H, L), dtype=jnp.float32)
    b2 = jnp.zeros((A, L), dtype=jnp.float32)

    params = {"embed_table": embed_table, "w1": w1, "b1": b1, "w2": w2, "b2": b2}

    input_ids = jax.random.randint(k_ids, (B, S), 0, VOCAB, dtype=jnp.int32)
    attention_mask = jnp.ones((B, S), dtype=jnp.int32)

    loss, logits = forward(input_ids, attention_mask, params)
    logits = jax.block_until_ready(logits)

    # Correctness checks
    pooled = synthetic_encoder(input_ids, attention_mask, embed_table)
    ref_bf16 = _reference_logits_bf16(pooled, w1, b1, w2, b2)  # same precision as kernel
    ref_f32 = _reference_logits_f32(pooled, w1, b1, w2, b2)    # full-precision sanity check

    assert logits.shape == (B, A, L), logits.shape
    assert jnp.allclose(logits, ref_bf16, atol=2e-3, rtol=2e-3), "mismatch vs bf16 reference"
    assert jnp.allclose(logits, ref_f32, atol=5e-2, rtol=5e-2), "mismatch vs f32 reference"
    assert float(loss) == 0.0

    print("KERNEL_OK")
</pallas_src>

<mosaic_0001>
module attributes {stable_mosaic.version = 11 : i64} {
  func.func @_head_block_kernel(%arg0: i32, %arg1: memref<2x32xf32, #tpu.memory_space<vmem>>, %arg2: memref<1x32x128xbf16, #tpu.memory_space<vmem>>, %arg3: memref<1x1x128xf32, #tpu.memory_space<vmem>>, %arg4: memref<1x128x8xbf16, #tpu.memory_space<vmem>>, %arg5: memref<1x1x8xf32, #tpu.memory_space<vmem>>, %arg6: memref<1x2x8xf32, #tpu.memory_space<vmem>>) attributes {dimension_semantics = [#tpu.dimension_semantics<parallel>], iteration_bounds = array<i64: 2>, scalar_prefetch = 0 : i64, scratch_operands = 0 : i64, tpu.core_type = #tpu.core_type<tc>, window_params = [{pipeline_mode = #tpu.pipeline_mode<synchronous>, transform_indices = @transform_0, window_bounds = array<i64: 2, 32>}, {transform_indices = @transform_1, window_bounds = array<i64: 1, 32, 128>}, {transform_indices = @transform_2, window_bounds = array<i64: 1, 1, 128>}, {transform_indices = @transform_3, window_bounds = array<i64: 1, 128, 8>}, {transform_indices = @transform_4, window_bounds = array<i64: 1, 1, 8>}, {transform_indices = @transform_5, window_bounds = array<i64: 1, 2, 8>}]} {
    %c0 = arith.constant 0 : index
    %c0_0 = arith.constant 0 : index
    %0 = vector.load %arg1[%c0, %c0_0] : memref<2x32xf32, #tpu.memory_space<vmem>>, vector<2x32xf32>
    %1 = arith.truncf %0 : vector<2x32xf32> to vector<2x32xbf16>
    %c0_1 = arith.constant 0 : index
    %c0_2 = arith.constant 0 : index
    %c0_3 = arith.constant 0 : index
    %2 = vector.load %arg2[%c0_1, %c0_2, %c0_3] : memref<1x32x128xbf16, #tpu.memory_space<vmem>>, vector<1x32x128xbf16>
    %3 = vector.shape_cast %2 : vector<1x32x128xbf16> to vector<32x128xbf16>
    %cst = arith.constant dense<0.000000e+00> : vector<2x128xf32>
    %4 = tpu.matmul %1, %3, %cst {dimension_numbers = #tpu.dot_dimension_numbers<[1], [0], [0], [1], [0, 0, 1, 1], [], []>} : vector<2x32xbf16>, vector<32x128xbf16>, vector<2x128xf32> -> vector<2x128xf32>
    %c0_4 = arith.constant 0 : index
    %c0_5 = arith.constant 0 : index
    %c0_6 = arith.constant 0 : index
    %5 = vector.load %arg3[%c0_4, %c0_5, %c0_6] : memref<1x1x128xf32, #tpu.memory_space<vmem>>, vector<1x1x128xf32>
    %6 = vector.shape_cast %5 : vector<1x1x128xf32> to vector<1x128xf32>
    %7 = vector.broadcast %6 : vector<1x128xf32> to vector<2x128xf32>
    %8 = arith.addf %4, %7 : vector<2x128xf32>
    %9 = math.tanh %8 : vector<2x128xf32>
    %10 = arith.truncf %9 : vector<2x128xf32> to vector<2x128xbf16>
    %c0_7 = arith.constant 0 : index
    %c0_8 = arith.constant 0 : index
    %c0_9 = arith.constant 0 : index
    %11 = vector.load %arg4[%c0_7, %c0_8, %c0_9] : memref<1x128x8xbf16, #tpu.memory_space<vmem>>, vector<1x128x8xbf16>
    %12 = vector.shape_cast %11 : vector<1x128x8xbf16> to vector<128x8xbf16>
    %cst_10 = arith.constant dense<0.000000e+00> : vector<2x8xf32>
    %13 = tpu.matmul %10, %12, %cst_10 {dimension_numbers = #tpu.dot_dimension_numbers<[1], [0], [0], [1], [0, 0, 1, 1], [], []>} : vector<2x128xbf16>, vector<128x8xbf16>, vector<2x8xf32> -> vector<2x8xf32>
    %c0_11 = arith.constant 0 : index
    %c0_12 = arith.constant 0 : index
    %c0_13 = arith.constant 0 : index
    %14 = vector.load %arg5[%c0_11, %c0_12, %c0_13] : memref<1x1x8xf32, #tpu.memory_space<vmem>>, vector<1x1x8xf32>
    %15 = vector.shape_cast %14 : vector<1x1x8xf32> to vector<1x8xf32>
    %16 = vector.broadcast %15 : vector<1x8xf32> to vector<2x8xf32>
    %17 = arith.addf %13, %16 : vector<2x8xf32>
    %c0_14 = arith.constant 0 : index
    %c0_15 = arith.constant 0 : index
    %c0_16 = arith.constant 0 : index
    %18 = vector.load %arg6[%c0_14, %c0_15, %c0_16] : memref<1x2x8xf32, #tpu.memory_space<vmem>>, vector<1x2x8xf32>
    %19 = vector.shape_cast %18 : vector<1x2x8xf32> to vector<2x8xf32>
    %20 = vector.shape_cast %17 : vector<2x8xf32> to vector<1x2x8xf32>
    tpu.vector_store %arg6[%c0_14, %c0_15, %c0_16], %20 {strides = array<i32>} : memref<1x2x8xf32, #tpu.memory_space<vmem>>, vector<1x2x8xf32>,
    return
  }
  func.func @transform_0(%arg0: i32) -> (i32, i32) {
    %c0_i32 = arith.constant 0 : i32
    %c0_i32_0 = arith.constant 0 : i32
    %c0_i32_1 = arith.constant 0 : i32
    return %c0_i32, %c0_i32_0 : i32, i32
  }
  func.func @transform_1(%arg0: i32) -> (i32, i32, i32) {
    %c0_i32 = arith.constant 0 : i32
    %c0_i32_0 = arith.constant 0 : i32
    %c0_i32_1 = arith.constant 0 : i32
    return %arg0, %c0_i32, %c0_i32_0 : i32, i32, i32
  }
  func.func @transform_2(%arg0: i32) -> (i32, i32, i32) {
    %c0_i32 = arith.constant 0 : i32
    %c0_i32_0 = arith.constant 0 : i32
    %c0_i32_1 = arith.constant 0 : i32
    return %arg0, %c0_i32, %c0_i32_0 : i32, i32, i32
  }
  func.func @transform_3(%arg0: i32) -> (i32, i32, i32) {
    %c0_i32 = arith.constant 0 : i32
    %c0_i32_0 = arith.constant 0 : i32
    %c0_i32_1 = arith.constant 0 : i32
    return %arg0, %c0_i32, %c0_i32_0 : i32, i32, i32
  }
  func.func @transform_4(%arg0: i32) -> (i32, i32, i32) {
    %c0_i32 = arith.constant 0 : i32
    %c0_i32_0 = arith.constant 0 : i32
    %c0_i32_1 = arith.constant 0 : i32
    return %arg0, %c0_i32, %c0_i32_0 : i32, i32, i32
  }
  func.func @transform_5(%arg0: i32) -> (i32, i32, i32) {
    %c0_i32 = arith.constant 0 : i32
    %c0_i32_0 = arith.constant 0 : i32
    %c0_i32_1 = arith.constant 0 : i32
    return %arg0, %c0_i32, %c0_i32_0 : i32, i32, i32
  }
}

</mosaic_0001>

<llo_original>
// kernel: per_annotator_logits.1
$region0: #{per_annotator_logits.1}
  #allocation0 [shape = 'u32[]', space=smem, size = 0x4, offset = 0x4, fixed_abs, tag = 'smem constant byte address 0x4 - core index']
  #allocation1 [shape = 'u32[144,128]{1,0:T(1,128)}', space=vmem, size = 0x12000, scoped, tag = 'internal scratch']
  %s0 = inlined_call_operand.vmem [shape: f32[2,32], index: 0, kind: input, shape index: {}]
  %s1 = inlined_call_operand.vmem [shape: bf16[2,32,128], index: 1, kind: input, shape index: {}]
  %s2 = inlined_call_operand.vmem [shape: f32[2,1,128], index: 2, kind: input, shape index: {}]
  %s3 = inlined_call_operand.vmem [shape: bf16[2,128,8], index: 3, kind: input, shape index: {}]
  %s4 = inlined_call_operand.vmem [shape: f32[2,1,8], index: 4, kind: input, shape index: {}]
  %s5 = inlined_call_operand.vmem [shape: f32[2,2,8], index: 5, kind: output, shape index: {}]
  %s6 = sld [smem:[#allocation0]]
  $region53: #{per_annotator_logits.1} parent=0
    _
  %s8 = ssub.s32 1, %s6
  %s9 = scalar_select 0, %s8, %s6
  loop: start=0, step=1, limit=4
  $region2: #{per_annotator_logits.1} parent=0 // loop_pre_header
    _
  $region3: #{per_annotator_logits.1} parent=0 // loop_header
    %s11 = sphi 0, %s15
    %p12 = scmp.ge.s32.totalorder %s11, 4
    %s19 = sphi 0, %s19
    %s21 = sphi 0, %s19
    %s22 = sphi 0, %s21
    %s36 = sphi 0, %s22
    %s42 = sphi 0, %s44
    %s45 = sphi 0, %s42
    %s46 = sphi 0, %s45
    %s62 = sphi 0, %s46
    %s68 = sphi 0, %s70
    %s71 = sphi 0, %s68
    %s72 = sphi 0, %s71
    %s88 = sphi 0, %s72
    %s94 = sphi 0, %s96
    %s97 = sphi 0, %s94
    %s98 = sphi 0, %s97
    %s114 = sphi 0, %s98
    %s120 = sphi 0, %s122
    %s123 = sphi 0, %s120
    %s124 = sphi 0, %s123
    %s140 = sphi 0, %s124
    %s146 = sphi 0, %s148
    %s149 = sphi 0, %s146
    %s150 = sphi 0, %s149
    %s166 = sphi 0, %s150
  $region4: #{per_annotator_logits.1} parent=0 // loop_header_branch
    %14 = sbr.rel (%p12) target = $region8
  $region5: #{per_annotator_logits.1} parent=0 // loop_body
    %s16 = ssub.s32 %s11, 1
    %s17 = ssub.s32 %s11, 2
    %s18 = sadd.s32 %s11, 1
    %s20 = sadd.s32 %s19, 1
    %p23 = scmp.eq.s32.totalorder %s11, 1
    %p24 = scmp.ne.s32.totalorder %s19, %s21
    %p25 = scmp.eq.s32.totalorder %s11, 0
    %p26 = por %p24, %p25
    %p27 = scmp.ne.s32.totalorder %s19, %s21
    %p28 = scmp.eq.s32.totalorder %s16, 1
    %p29 = por %p27, %p28
    %p30 = scmp.ne.s32.totalorder %s21, %s22
    %p31 = scmp.eq.s32.totalorder %s16, 0
    %p32 = por %p30, %p31
    %p33 = scmp.ne.s32.totalorder %s21, %s22
    %p34 = scmp.eq.s32.totalorder %s17, 1
    %p35 = por %p33, %p34
    %p37 = scmp.ne.s32.totalorder %s22, %s36
    %p38 = scmp.eq.s32.totalorder %s17, 0
    %p39 = por %p37, %p38
    %s40 = ssub.s32 %s11, %s18
    %p41 = scmp.eq.s32.totalorder %s40, 0
    %s43 = sadd.s32 %s42, 1
    %s44 = scalar_select %p41, %s42, %s43
    %p47 = pneg %p41
    %p48 = scmp.eq.s32.totalorder %s11, 1
    %p49 = por %p47, %p48
    %p50 = scmp.ne.s32.totalorder %s42, %s45
    %p51 = scmp.eq.s32.totalorder %s11, 0
    %p52 = por %p50, %p51
    %p53 = scmp.ne.s32.totalorder %s42, %s45
    %p54 = scmp.eq.s32.totalorder %s16, 1
    %p55 = por %p53, %p54
    %p56 = scmp.ne.s32.totalorder %s45, %s46
    %p57 = scmp.eq.s32.totalorder %s16, 0
    %p58 = por %p56, %p57
    %p59 = scmp.ne.s32.totalorder %s45, %s46
    %p60 = scmp.eq.s32.totalorder %s17, 1
    %p61 = por %p59, %p60
    %p63 = scmp.ne.s32.totalorder %s46, %s62
    %p64 = scmp.eq.s32.totalorder %s17, 0
    %p65 = por %p63, %p64
    %s66 = ssub.s32 %s11, %s18
    %p67 = scmp.eq.s32.totalorder %s66, 0
    %s69 = sadd.s32 %s68, 1
    %s70 = scalar_select %p67, %s68, %s69
    %p73 = pneg %p67
    %p74 = scmp.eq.s32.totalorder %s11, 1
    %p75 = por %p73, %p74
    %p76 = scmp.ne.s32.totalorder %s68, %s71
    %p77 = scmp.eq.s32.totalorder %s11, 0
    %p78 = por %p76, %p77
    %p79 = scmp.ne.s32.totalorder %s68, %s71
    %p80 = scmp.eq.s32.totalorder %s16, 1
    %p81 = por %p79, %p80
    %p82 = scmp.ne.s32.totalorder %s71, %s72
    %p83 = scmp.eq.s32.totalorder %s16, 0
    %p84 = por %p82, %p83
    %p85 = scmp.ne.s32.totalorder %s71, %s72
    %p86 = scmp.eq.s32.totalorder %s17, 1
    %p87 = por %p85, %p86
    %p89 = scmp.ne.s32.totalorder %s72, %s88
    %p90 = scmp.eq.s32.totalorder %s17, 0
    %p91 = por %p89, %p90
    %s92 = ssub.s32 %s11, %s18
    %p93 = scmp.eq.s32.totalorder %s92, 0
    %s95 = sadd.s32 %s94, 1
    %s96 = scalar_select %p93, %s94, %s95
    %p99 = pneg %p93
    %p100 = scmp.eq.s32.totalorder %s11, 1
    %p101 = por %p99, %p100
    %p102 = scmp.ne.s32.totalorder %s94, %s97
    %p103 = scmp.eq.s32.totalorder %s11, 0
    %p104 = por %p102, %p103
    %p105 = scmp.ne.s32.totalorder %s94, %s97
    %p106 = scmp.eq.s32.totalorder %s16, 1
    %p107 = por %p105, %p106
    %p108 = scmp.ne.s32.totalorder %s97, %s98
    %p109 = scmp.eq.s32.totalorder %s16, 0
    %p110 = por %p108, %p109
    %p111 = scmp.ne.s32.totalorder %s97, %s98
    %p112 = scmp.eq.s32.totalorder %s17, 1
    %p113 = por %p111, %p112
    %p115 = scmp.ne.s32.totalorder %s98, %s114
    %p116 = scmp.eq.s32.totalorder %s17, 0
    %p117 = por %p115, %p116
    %s118 = ssub.s32 %s11, %s18
    %p119 = scmp.eq.s32.totalorder %s118, 0
    %s121 = sadd.s32 %s120, 1
    %s122 = scalar_select %p119, %s120, %s121
    %p125 = pneg %p119
    %p126 = scmp.eq.s32.totalorder %s11, 1
    %p127 = por %p125, %p126
    %p128 = scmp.ne.s32.totalorder %s120, %s123
    %p129 = scmp.eq.s32.totalorder %s11, 0
    %p130 = por %p128, %p129
    %p131 = scmp.ne.s32.totalorder %s120, %s123
    %p132 = scmp.eq.s32.totalorder %s16, 1
    %p133 = por %p131, %p132
    %p134 = scmp.ne.s32.totalorder %s123, %s124
    %p135 = scmp.eq.s32.totalorder %s16, 0
    %p136 = por %p134, %p135
    %p137 = scmp.ne.s32.totalorder %s123, %s124
    %p138 = scmp.eq.s32.totalorder %s17, 1
    %p139 = por %p137, %p138
    %p141 = scmp.ne.s32.totalorder %s124, %s140
    %p142 = scmp.eq.s32.totalorder %s17, 0
    %p143 = por %p141, %p142
    %s144 = ssub.s32 %s11, %s18
    %p145 = scmp.eq.s32.totalorder %s144, 0
    %s147 = sadd.s32 %s146, 1
    %s148 = scalar_select %p145, %s146, %s147
    %p151 = pneg %p145
    %p152 = scmp.eq.s32.totalorder %s11, 1
    %p153 = por %p151, %p152
    %p154 = scmp.ne.s32.totalorder %s146, %s149
    %p155 = scmp.eq.s32.totalorder %s11, 0
    %p156 = por %p154, %p155
    %p157 = scmp.ne.s32.totalorder %s146, %s149
    %p158 = scmp.eq.s32.totalorder %s16, 1
    %p159 = por %p157, %p158
    %p160 = scmp.ne.s32.totalorder %s149, %s150
    %p161 = scmp.eq.s32.totalorder %s16, 0
    %p162 = por %p160, %p161
    %p163 = scmp.ne.s32.totalorder %s149, %s150
    %p164 = scmp.eq.s32.totalorder %s17, 1
    %p165 = por %p163, %p164
    %p167 = scmp.ne.s32.totalorder %s150, %s166
    %p168 = scmp.eq.s32.totalorder %s17, 0
    %p169 = por %p167, %p168
    %p170 = scmp.le.s32.totalorder 1, %s11
    %p171 = scmp.lt.s32.totalorder %s11, 3
    %p172 = pnand %p170, %p171
    %p173 = pneg %p172
    // Predicated region
    $region9: #{per_annotator_logits.1} parent=5 // pred_check
      _
    $region10: #{per_annotator_logits.1} parent=5 // pred_check_branch
      %175 = sbr.rel (%p172) target = $region12
    $region11: #{per_annotator_logits.1} parent=5 // pred_region
      %s176 = ssub.s32 %s11, 1
      // Predicated region
      $region13: #{per_annotator_logits.1} parent=11 // pred_check
        %p177 = pneg %p32
      $region14: #{per_annotator_logits.1} parent=11 // pred_check_branch
        %179 = sbr.rel (%p177) target = $region16
      $region15: #{per_annotator_logits.1} parent=11 // pred_region
        _
      $region16: #{per_annotator_logits.1} parent=11 // pred_fallthru
        _
    $region12: #{per_annotator_logits.1} parent=5 // pred_fallthru
      _
    %p180 = scmp.lt.s32.totalorder %s11, 2
    // Predicated region
    $region17: #{per_annotator_logits.1} parent=5 // pred_check
      %p181 = pneg %p180
    $region18: #{per_annotator_logits.1} parent=5 // pred_check_branch
      %183 = sbr.rel (%p181) target = $region20
    $region19: #{per_annotator_logits.1} parent=5 // pred_region
      // Predicated region
      $region21: #{per_annotator_logits.1} parent=19 // pred_check
        %p184 = pneg %p52
      $region22: #{per_annotator_logits.1} parent=19 // pred_check_branch
        %186 = sbr.rel (%p184) target = $region24
      $region23: #{per_annotator_logits.1} parent=19 // pred_region
        %p187 = scmp.lt.s32.totalorder %s11, 1
        %s188 = scalar_select %p187, %s11, 1
        %s189 = smul.addr %s188, 4
        %s190 = smul.addr %s189, 4
        %s191 = scalar_lea.vmem %s1, %s190
      $region24: #{per_annotator_logits.1} parent=19 // pred_fallthru
        _
      // Predicated region
      $region25: #{per_annotator_logits.1} parent=19 // pred_check
        %p192 = pneg %p78
      $region26: #{per_annotator_logits.1} parent=19 // pred_check_branch
        %194 = sbr.rel (%p192) target = $region28
      $region27: #{per_annotator_logits.1} parent=19 // pred_region
        %p195 = scmp.lt.s32.totalorder %s11, 1
        %s196 = scalar_select %p195, %s11, 1
        %s197 = scalar_lea.vmem %s2, %s196
      $region28: #{per_annotator_logits.1} parent=19 // pred_fallthru
        _
      // Predicated region
      $region29: #{per_annotator_logits.1} parent=19 // pred_check
        %p198 = pneg %p104
      $region30: #{per_annotator_logits.1} parent=19 // pred_check_branch
        %200 = sbr.rel (%p198) target = $region32
      $region31: #{per_annotator_logits.1} parent=19 // pred_region
        %p201 = scmp.lt.s32.totalorder %s11, 1
        %s202 = scalar_select %p201, %s11, 1
        %s203 = smul.addr %s202, 16
        %s204 = smul.addr %s203, 4
        %s205 = scalar_lea.vmem %s3, %s204
      $region32: #{per_annotator_logits.1} parent=19 // pred_fallthru
        _
      // Predicated region
      $region33: #{per_annotator_logits.1} parent=19 // pred_check
        %p206 = pneg %p130
      $region34: #{per_annotator_logits.1} parent=19 // pred_check_branch
        %208 = sbr.rel (%p206) target = $region36
      $region35: #{per_annotator_logits.1} parent=19 // pred_region
        %p209 = scmp.lt.s32.totalorder %s11, 1
        %s210 = scalar_select %p209, %s11, 1
        %s211 = scalar_lea.vmem %s4, %s210
      $region36: #{per_annotator_logits.1} parent=19 // pred_fallthru
        _
    $region20: #{per_annotator_logits.1} parent=5 // pred_fallthru
      _
    %p212 = scmp.le.s32.totalorder 1, %s11
    %p213 = scmp.lt.s32.totalorder %s11, 3
    %p214 = pnand %p212, %p213
    %p215 = pneg %p214
    // Predicated region
    $region37: #{per_annotator_logits.1} parent=5 // pred_check
      _
    $region38: #{per_annotator_logits.1} parent=5 // pred_check_branch
      %217 = sbr.rel (%p214) target = $region40
    $region39: #{per_annotator_logits.1} parent=5 // pred_region
      %s218 = ssub.s32 %s11, 1
      %p219 = pneg %p32
      %p220 = pneg %p29
      %p221 = scmp.lt.s32.totalorder %s16, 1
      %s222 = scalar_select %p221, %s16, 1
      %s223 = smul.addr %s222, 4
      %s224 = smul.addr %s223, 4
      %s225 = scalar_lea.vmem %s1, %s224
      %p226 = pneg %p58
      %p227 = pneg %p55
      %p228 = scmp.lt.s32.totalorder %s16, 1
      %s229 = scalar_select %p228, %s16, 1
      %s230 = scalar_lea.vmem %s2, %s229
      %p231 = pneg %p84
      %p232 = pneg %p81
      %p233 = scmp.lt.s32.totalorder %s16, 1
      %s234 = scalar_select %p233, %s16, 1
      %s235 = smul.addr %s234, 16
      %s236 = smul.addr %s235, 4
      %s237 = scalar_lea.vmem %s3, %s236
      %p238 = pneg %p110
      %p239 = pneg %p107
      %p240 = scmp.lt.s32.totalorder %s16, 1
      %s241 = scalar_select %p240, %s16, 1
      %s242 = scalar_lea.vmem %s4, %s241
      %p243 = pneg %p136
      %p244 = pneg %p133
      %p245 = pneg %p162
      %p246 = pneg %p159
      %p247 = scmp.lt.s32.totalorder %s16, 1
      %s248 = scalar_select %p247, %s16, 1
      %s249 = smul.addr %s248, 2
      %s250 = scalar_lea.vmem %s5, %s249
      %p251 = scmp.lt.s32.totalorder %s16, 1
      %s252 = scalar_select %p251, %s16, 1
      %s253 = smul.addr %s252, 4
      %s254 = smul.addr %s253, 4
      %s255 = scalar_lea.vmem %s1, %s254
      %p256 = scmp.lt.s32.totalorder %s16, 1
      %s257 = scalar_select %p256, %s16, 1
      %s258 = scalar_lea.vmem %s2, %s257
      %p259 = scmp.lt.s32.totalorder %s16, 1
      %s260 = scalar_select %p259, %s16, 1
      %s261 = smul.addr %s260, 16
      %s262 = smul.addr %s261, 4
      %s263 = scalar_lea.vmem %s3, %s262
      %p264 = scmp.lt.s32.totalorder %s16, 1
      %s265 = scalar_select %p264, %s16, 1
      %s266 = scalar_lea.vmem %s4, %s265
      %p267 = scmp.lt.s32.totalorder %s16, 1
      %s268 = scalar_select %p267, %s16, 1
      %s269 = smul.addr %s268, 2
      %s270 = scalar_lea.vmem %s5, %s269
      %v272 = vld [vmem:[%s0] sm:$0x3]
      %v273 = vpack.c.bf16 %v272, %v272
      %v274 = vld [vmem:[%s255] sm:$0xf]
      %v275 = vld [vmem:[%s255 + $0x4] sm:$0xf]
      %v276 = vld [vmem:[%s255 + $0x8] sm:$0xf]
      %v277 = vld [vmem:[%s255 + $0xc] sm:$0xf]
      %v278 = vld [vmem:[%s258] sm:$0x1]
      %v280 = vlaneseq
      %v281 = vshrl.u32 %v280, 7
      %v282 = vsub.s32 0, %v281
      %v283 = vrot.slane %v278, %v282
      %v289 = vunpack.c.l.b16 %v274
      %v290 = vunpack.c.l.b16 %v275
      %v291 = vunpack.c.l.b16 %v276
      %v292 = vunpack.c.l.b16 %v277
      %v293 = vpack.c.b16 %v290, %v289
      %v294 = vpack.c.b16 %v292, %v291
      %vm297 = vcmask 261120
      %v299 = vsel %vm297, %v273, 0
      %301 = vmatprep.subr.bf16.mxu0 0
      %302 = vmatpush1.bf16.msra.mxu0 %v293
      %303 = vmatprep.subr.bf16.mxu0 0
      %304 = vmatpush1.bf16.msra.mxu0 %v294
      %305 = vmatprep.subr.bf16.mxu0 0
      %306 = vmatpush1.bf16.msra.mxu0 0
      %307 = vmatprep.subr.bf16.mxu0 0
      %308 = vmatpush1.bf16.msra.mxu0 0
      %309 = vmatprep.subr.bf16.mxu0 0
      %310 = vmatpush1.bf16.msra.mxu0 0
      %311 = vmatprep.subr.bf16.mxu0 0
      %312 = vmatpush1.bf16.msra.mxu0 0
      %313 = vmatprep.subr.bf16.mxu0 0
      %314 = vmatpush1.bf16.msra.mxu0 0
      %315 = vmatprep.subr.bf16.mxu0 0
      %316 = vmatpush1.bf16.msra.mxu0 0
      %317 = vmatprep.subr.bf16.mxu0 0
      %318 = vmatpush1.bf16.msra.mxu0 0
      %319 = vmatprep.subr.bf16.mxu0 0
      %320 = vmatpush1.bf16.msra.mxu0 0
      %321 = vmatprep.subr.bf16.mxu0 0
      %322 = vmatpush1.bf16.msra.mxu0 0
      %323 = vmatprep.subr.bf16.mxu0 0
      %324 = vmatpush1.bf16.msra.mxu0 0
      %325 = vmatprep.subr.bf16.mxu0 0
      %326 = vmatpush1.bf16.msra.mxu0 0
      %327 = vmatprep.subr.bf16.mxu0 0
      %328 = vmatpush1.bf16.msra.mxu0 0
      %329 = vmatprep.subr.bf16.mxu0 0
      %330 = vmatpush1.bf16.msra.mxu0 0
      %331 = vmatprep.subr.bf16.mxu0 0
      %332 = vmatpush1.bf16.msra.mxu0 0
      %333 = vmatprep.mubr.bf16.mxu0 0
      %334 = vmatmul.mubr.bf16.gmra.mrb[0].mxu0 %v299
      %v335 = vpop.f32.mrb[0].mxu0
      %v336 = vadd.f32 %v283, %v335
      %v337 = vpop.f32.mrb[0].mxu0
      %v338 = vpop.f32.mrb[0].mxu0
      %v339 = vpop.f32.mrb[0].mxu0
      %340 = vdwg.mxu0
      %v341 = vtanh.pop %v336
      %v342 = vpack.c.bf16 %v341, %v341
      %v343 = vld [vmem:[%s263] sm:$0xf]
      %v344 = vld [vmem:[%s263 + $0x4] sm:$0xf]
      %v345 = vld [vmem:[%s263 + $0x8] sm:$0xf]
      %v346 = vld [vmem:[%s263 + $0xc] sm:$0xf]
      %v347 = vld [vmem:[%s263 + $0x10] sm:$0xf]
      %v348 = vld [vmem:[%s263 + $0x14] sm:$0xf]
      %v349 = vld [vmem:[%s263 + $0x18] sm:$0xf]
      %v350 = vld [vmem:[%s263 + $0x1c] sm:$0xf]
      %v351 = vld [vmem:[%s263 + $0x20] sm:$0xf]
      %v352 = vld [vmem:[%s263 + $0x24] sm:$0xf]
      %v353 = vld [vmem:[%s263 + $0x28] sm:$0xf]
      %v354 = vld [vmem:[%s263 + $0x2c] sm:$0xf]
      %v355 = vld [vmem:[%s263 + $0x30] sm:$0xf]
      %v356 = vld [vmem:[%s263 + $0x34] sm:$0xf]
      %v357 = vld [vmem:[%s263 + $0x38] sm:$0xf]
      %v358 = vld [vmem:[%s263 + $0x3c] sm:$0xf]
      %v359 = vld [vmem:[%s266] sm:$0x1]
      %v361 = vlaneseq
      %v362 = vshrl.u32 %v361, 7
      %v363 = vsub.s32 0, %v362
      %v364 = vrot.slane %v359, %v363
      %v382 = vunpack.c.l.b16 %v343
      %v383 = vunpack.c.l.b16 %v344
      %v384 = vunpack.c.l.b16 %v345
      %v385 = vunpack.c.l.b16 %v346
      %v386 = vunpack.c.l.b16 %v347
      %v387 = vunpack.c.l.b16 %v348
      %v388 = vunpack.c.l.b16 %v349
      %v389 = vunpack.c.l.b16 %v350
      %v390 = vunpack.c.l.b16 %v351
      %v391 = vunpack.c.l.b16 %v352
      %v392 = vunpack.c.l.b16 %v353
      %v393 = vunpack.c.l.b16 %v354
      %v394 = vunpack.c.l.b16 %v355
      %v395 = vunpack.c.l.b16 %v356
      %v396 = vunpack.c.l.b16 %v357
      %v397 = vunpack.c.l.b16 %v358
      %v398 = vpack.c.b16 %v383, %v382
      %v399 = vpack.c.b16 %v385, %v384
      %v400 = vpack.c.b16 %v387, %v386
      %v401 = vpack.c.b16 %v389, %v388
      %v402 = vpack.c.b16 %v391, %v390
      %v403 = vpack.c.b16 %v393, %v392
      %v404 = vpack.c.b16 %v395, %v394
      %v405 = vpack.c.b16 %v397, %v396
      %414 = vmatprep.subr.bf16.mxu0 0
      %415 = vmatpush1.bf16.msra.mxu0 %v398
      %416 = vmatprep.subr.bf16.mxu0 0
      %417 = vmatpush1.bf16.msra.mxu0 %v399
      %418 = vmatprep.subr.bf16.mxu0 0
      %419 = vmatpush1.bf16.msra.mxu0 %v400
      %420 = vmatprep.subr.bf16.mxu0 0
      %421 = vmatpush1.bf16.msra.mxu0 %v401
      %422 = vmatprep.subr.bf16.mxu0 0
      %423 = vmatpush1.bf16.msra.mxu0 %v402
      %424 = vmatprep.subr.bf16.mxu0 0
      %425 = vmatpush1.bf16.msra.mxu0 %v403
      %426 = vmatprep.subr.bf16.mxu0 0
      %427 = vmatpush1.bf16.msra.mxu0 %v404
      %428 = vmatprep.subr.bf16.mxu0 0
      %429 = vmatpush1.bf16.msra.mxu0 %v405
      %430 = vmatprep.subr.bf16.mxu0 0
      %431 = vmatpush1.bf16.msra.mxu0 0
      %432 = vmatprep.subr.bf16.mxu0 0
      %433 = vmatpush1.bf16.msra.mxu0 0
      %434 = vmatprep.subr.bf16.mxu0 0
      %435 = vmatpush1.bf16.msra.mxu0 0
      %436 = vmatprep.subr.bf16.mxu0 0
      %437 = vmatpush1.bf16.msra.mxu0 0
      %438 = vmatprep.subr.bf16.mxu0 0
      %439 = vmatpush1.bf16.msra.mxu0 0
      %440 = vmatprep.subr.bf16.mxu0 0
      %441 = vmatpush1.bf16.msra.mxu0 0
      %442 = vmatprep.subr.bf16.mxu0 0
      %443 = vmatpush1.bf16.msra.mxu0 0
      %444 = vmatprep.subr.bf16.mxu0 0
      %445 = vmatpush1.bf16.msra.mxu0 0
      %446 = vmatprep.mubr.bf16.mxu0 0
      %447 = vmatmul.mubr.bf16.gmra.mrb[0].mxu0 %v342
      %v448 = vpop.f32.mrb[0].mxu0
      %v449 = vadd.f32 %v364, %v448
      %v450 = vpop.f32.mrb[0].mxu0
      %v451 = vpop.f32.mrb[0].mxu0
      %v452 = vpop.f32.mrb[0].mxu0
      %453 = vdwg.mxu0
      %vm454 = vcmask 58368
      %455 = vst.msk [vmem:[%s270] sm:$0x3] %vm454, %v449
      %p456 = scmp.lt.s32.totalorder %s16, 1
      %s457 = scalar_select %p456, %s16, 1
      %s458 = smul.addr %s457, 2
      %s459 = scalar_lea.vmem %s5, %s458
      // Predicated region
      $region41: #{per_annotator_logits.1} parent=39 // pred_check
        %p460 = pneg %p159
      $region42: #{per_annotator_logits.1} parent=39 // pred_check_branch
        %462 = sbr.rel (%p460) target = $region44
      $region43: #{per_annotator_logits.1} parent=39 // pred_region
        _
      $region44: #{per_annotator_logits.1} parent=39 // pred_fallthru
        _
    $region40: #{per_annotator_logits.1} parent=5 // pred_fallthru
      _
    %p463 = scmp.le.s32.totalorder 2, %s11
    // Predicated region
    $region45: #{per_annotator_logits.1} parent=5 // pred_check
      %p464 = pneg %p463
    $region46: #{per_annotator_logits.1} parent=5 // pred_check_branch
      %466 = sbr.rel (%p464) target = $region48
    $region47: #{per_annotator_logits.1} parent=5 // pred_region
      %s467 = ssub.s32 %s11, 2
      // Predicated region
      $region49: #{per_annotator_logits.1} parent=47 // pred_check
        %p468 = pneg %p165
      $region50: #{per_annotator_logits.1} parent=47 // pred_check_branch
        %470 = sbr.rel (%p468) target = $region52
      $region51: #{per_annotator_logits.1} parent=47 // pred_region
        %p471 = scmp.lt.s32.totalorder %s17, 1
        %s472 = scalar_select %p471, %s17, 1
        %s473 = smul.addr %s472, 2
        %s474 = scalar_lea.vmem %s5, %s473
      $region52: #{per_annotator_logits.1} parent=47 // pred_fallthru
        _
    $region48: #{per_annotator_logits.1} parent=5 // pred_fallthru
      _
  $region6: #{per_annotator_logits.1} parent=0 // loop_footer
    %s15 = sadd.s32 1, %s11
  $region7: #{per_annotator_logits.1} parent=0 // loop_footer_branch
    %10 = sbr.rel target = $region3
  $region8: #{per_annotator_logits.1} parent=0 // loop_exit
    _

</llo_original>
